<compile_context>
chip_gen: v7x
topology: tpu7x:2x2x1
jax: 0.10.0
libtpu: 0.0.40
codegen_flags: <defaults>
</compile_context>

<pallas_src>
import functools

import jax
import jax.numpy as jnp
from jax.experimental import pallas as pl
from jax.experimental.pallas import tpu as pltpu


def _round_up(x, m):
    return ((x + m - 1) // m) * m


# ----------------------------------------------------------------------------
# Tile selection (generation-portable VMEM budgeting)
# ----------------------------------------------------------------------------

_ROW_TILE_CANDIDATES = (1024, 512, 256, 128, 64, 32, 16, 8)
_VMEM_TILE_TARGET = 36 << 20      # leaves headroom on v7x's 64 MiB physical VMEM
_W_TILE_BUDGET_DEFAULT = 8 << 20  # single-block W if it fits in 8 MiB (bf16)


def _tile_vmem_bytes(tm, tk, d_out, nk):
    x_tile = tm * tk * 4            # f32 activations (double-buffered)
    out_tile = tm * d_out * 4       # f32 outputs     (double-buffered)
    w_tile = tk * d_out * 2         # bf16 weights    (double-buffered worst case)
    acc = tm * d_out * 4 if nk > 1 else 0
    return 2 * (x_tile + out_tile + w_tile) + acc + d_out * 4


def _choose_tiles(n, d_in, d_out, *, w_tile_budget_bytes):
    # --- K (reduction) tile ---
    # Keep W as one block when small; otherwise tile K in 256-multiples
    # (v6e/v7x MXU is 2x256x256; 128/256 both fine on v5e's 128-wide MXU).
    if d_in % 256 != 0 or d_in * d_out * 2 <= w_tile_budget_bytes:
        tk = d_in
    else:
        tk = 256
        for cand in (2048, 1024, 512):
            if d_in % cand == 0 and cand * d_out * 2 <= w_tile_budget_bytes:
                tk = cand
                break
    nk = d_in // tk

    # --- Row (M) tile ---
    # Small n: a single full-row block (legal for any n, no padding at all).
    if n <= 512 and _tile_vmem_bytes(n, tk, d_out, nk) <= _VMEM_TILE_TARGET:
        return n, tk
    # Large n: biggest standard tile that divides round_up(n, 8) and fits VMEM
    # (~0.35 us per grid step; 512+-row tiles reach ~85% of HBM roofline).
    n_pad8 = _round_up(max(n, 1), 8)
    for cand in _ROW_TILE_CANDIDATES:
        if n_pad8 % cand == 0 and _tile_vmem_bytes(cand, tk, d_out, nk) <= _VMEM_TILE_TARGET:
            return cand, tk
    return 8, tk  # last resort (only if d_out is enormous)


# ----------------------------------------------------------------------------
# Kernels
# ----------------------------------------------------------------------------

def _linear_kernel(x_ref, w_ref, b_ref, o_ref):
    # Single K block: bf16 MXU matmul with f32 accumulation, f32 bias add.
    acc = jnp.dot(x_ref[...].astype(jnp.bfloat16), w_ref[...],
                  preferred_element_type=jnp.float32)
    o_ref[...] = (acc + b_ref[...]).astype(o_ref.dtype)


def _linear_kernel_ktiled(x_ref, w_ref, b_ref, o_ref, acc_ref):
    # K-tiled path: f32 accumulator in VMEM scratch, init at k==0,
    # bias add + writeback at the last K block.
    k = pl.program_id(2)

    @pl.when(k == 0)
    def _():
        acc_ref[...] = jnp.zeros_like(acc_ref)

    acc_ref[...] += jnp.dot(x_ref[...].astype(jnp.bfloat16), w_ref[...],
                            preferred_element_type=jnp.float32)

    @pl.when(k == pl.num_programs(2) - 1)
    def _():
        o_ref[...] = (acc_ref[...] + b_ref[...]).astype(o_ref.dtype)


# ----------------------------------------------------------------------------
# pallas_call builder + jitted wrapper
# ----------------------------------------------------------------------------

def _build_linear_call(L, n_pad, d_in, d_out, out_dtype, *, tm, tk):
    nm = n_pad // tm
    nk = d_in // tk

    # Put the larger parallel axis first so v7x's 2 TensorCores stay balanced
    # even when L == 1 (single-tensor path) or nm == 1 (small inputs).
    l_first = L >= nm
    if l_first:
        grid2 = (L, nm)
        lm = lambda a, b: (a, b)       # (l, m)
    else:
        grid2 = (nm, L)
        lm = lambda a, b: (b, a)       # (l, m)

    need = _tile_vmem_bytes(tm, tk, d_out, nk)
    vmem_limit = min(max(int(need * 1.5) + (4 << 20), 32 << 20), 60 << 20)

    flops = 2 * L * n_pad * d_in * d_out
    bytes_acc = (L * n_pad * d_in * 4          # x (f32)
                 + d_in * d_out * 2            # W (bf16)
                 + d_out * 4                   # b
                 + L * n_pad * d_out * 4)      # out (f32)
    cost = pl.CostEstimate(flops=flops, transcendentals=0,
                           bytes_accessed=bytes_acc)

    if nk == 1:
        kernel = _linear_kernel
        grid = grid2
        in_specs = [
            pl.BlockSpec((None, tm, d_in), lambda a, b: (*lm(a, b), 0)),
            # W, b: constant index_map -> DMA'd once, stay VMEM-resident.
            pl.BlockSpec((d_in, d_out), lambda a, b: (0, 0)),
            pl.BlockSpec((1, d_out), lambda a, b: (0, 0)),
        ]
        out_specs = pl.BlockSpec((None, tm, d_out), lambda a, b: (*lm(a, b), 0))
        scratch = []
        semantics = ("parallel", "parallel")
    else:
        kernel = _linear_kernel_ktiled
        grid = grid2 + (nk,)           # reduction axis last
        in_specs = [
            pl.BlockSpec((None, tm, tk), lambda a, b, k: (*lm(a, b), k)),
            pl.BlockSpec((tk, d_out), lambda a, b, k: (k, 0)),
            pl.BlockSpec((1, d_out), lambda a, b, k: (0, 0)),
        ]
        out_specs = pl.BlockSpec((None, tm, d_out),
                                 lambda a, b, k: (*lm(a, b), 0))
        scratch = [pltpu.VMEM((tm, d_out), jnp.float32)]
        semantics = ("parallel", "parallel", "arbitrary")

    return pl.pallas_call(
        kernel,
        out_shape=jax.ShapeDtypeStruct((L, n_pad, d_out), out_dtype),
        grid_spec=pltpu.PrefetchScalarGridSpec(
            num_scalar_prefetch=0,
            grid=grid,
            in_specs=in_specs,
            out_specs=out_specs,
            scratch_shapes=scratch,
        ),
        compiler_params=pltpu.CompilerParams(
            dimension_semantics=semantics,
            vmem_limit_bytes=vmem_limit,
        ),
        cost_estimate=cost,
    )


@functools.partial(jax.jit, static_argnames=("tm", "tk"))
def _fused_linear(xs, w, b, *, tm, tk):
    """xs: [L, N, D_in] (any N; any D_in), w: [D_in, D_out] bf16, b: [1, D_out] f32."""
    L, n, d_in = xs.shape
    d_out = w.shape[1]
    # Common path: no padding at all (full-dim blocks are legal).  Only ragged
    # n spanning multiple row tiles pads rows (<= tm-1, typically <= 7 rows).
    n_pad = n if tm == n else _round_up(n, tm)
    if n_pad != n:
        xs = jnp.pad(xs, ((0, 0), (0, n_pad - n), (0, 0)))
    out = _build_linear_call(L, n_pad, d_in, d_out, xs.dtype, tm=tm, tk=tk)(xs, w, b)
    if n_pad != n:
        out = out[:, :n]
    return out


# ----------------------------------------------------------------------------
# Modules
# ----------------------------------------------------------------------------

class PallasLinear:
    """Inner module: y = x @ W + b with a Pallas TPU matmul kernel."""

    def __init__(self, w, b, *, w_tile_budget_bytes=_W_TILE_BUDGET_DEFAULT):
        d_in, d_out = w.shape
        self.d_in, self.d_out = d_in, d_out
        # bf16 weights: MXU-native on v5e/v6e/v7x, halves W HBM->VMEM DMA bytes
        # and VMEM footprint.  Bias stays f32 (added post-MXU on the VPU).
        self.w = jnp.asarray(w, jnp.bfloat16)
        self.b = jnp.asarray(jnp.reshape(b, (1, -1)), jnp.float32)
        self.w_tile_budget_bytes = w_tile_budget_bytes

    def apply_batched(self, xs):
        # xs: [L, N, D_in] -> [L, N, D_out] in a single pallas_call.
        _, n, d_in = xs.shape
        assert d_in == self.d_in
        tm, tk = _choose_tiles(n, d_in, self.d_out,
                               w_tile_budget_bytes=self.w_tile_budget_bytes)
        return _fused_linear(xs, self.w, self.b, tm=tm, tk=tk)

    def __call__(self, x):
        # Single-tensor path: batch of 1.
        return self.apply_batched(x[None])[0]


class ApplyToList:
    """JAX/Pallas port of the PyTorch ApplyToList module: list/tuple input ->
    list of per-element results, otherwise apply directly."""

    def __init__(self, module_to_apply):
        self.mod = module_to_apply

    def __call__(self, x):
        if type(x) in [list, tuple]:
            if (len(x) > 0
                    and hasattr(self.mod, "apply_batched")
                    and all(hasattr(e, "shape") and hasattr(e, "dtype")
                            and getattr(e, "ndim", 0) == 2 for e in x)):
                # Group same-(shape, dtype) elements and run ONE fused
                # pallas_call per group: weights DMA'd once per group, a single
                # dispatch instead of len(group) launches.
                groups = {}
                for i, e in enumerate(x):
                    groups.setdefault((tuple(e.shape), e.dtype), []).append(i)
                out = [None] * len(x)
                for idxs in groups.values():
                    # TODO(synk): if the upstream producer already emits a
                    # stacked [L, N, D_in] array, pass it straight to
                    # apply_batched and skip this jnp.stack HBM copy.
                    stacked = jnp.stack([x[i] for i in idxs], axis=0)
                    ys = self.mod.apply_batched(stacked)
                    for j, i in enumerate(idxs):
                        out[i] = ys[j]
                return out
            # Fallback preserves exact element-wise semantics for arbitrary mods.
            return [self.mod(elem) for elem in x]
        else:
            return self.mod(x)


# ----------------------------------------------------------------------------
# Demo / correctness checks
# ----------------------------------------------------------------------------

if __name__ == "__main__":
    key = jax.random.PRNGKey(0)
    keys = jax.random.split(key, 8)

    N, D_IN, D_OUT = 8, 32, 32  # small demo shapes

    # Deterministic synthetic parameters for the inner Linear module.
    # (Stored as [D_in, D_out], i.e. transpose of nn.Linear's [out, in].)
    w = jax.random.normal(keys[0], (D_IN, D_OUT), jnp.float32) / jnp.sqrt(D_IN)
    b = jax.random.normal(keys[1], (1, D_OUT), jnp.float32) * 0.01

    inner = PallasLinear(w, b)
    apply_to_list = ApplyToList(inner)

    def ref(x):
        return x @ w + b

    tol = dict(atol=5e-2, rtol=5e-2)  # bf16 MXU operands, f32 accumulation

    # Case 1: single tensor input.
    x_single = jax.random.normal(keys[2], (N, D_IN), jnp.float32)
    y_single = apply_to_list(x_single)
    jax.block_until_ready(y_single)
    assert y_single.shape == (N, D_OUT)
    assert jnp.allclose(y_single, ref(x_single), **tol)

    # Case 2: same-shaped list -> ONE fused pallas_call.
    x_list = [jax.random.normal(keys[3], (N, D_IN), jnp.float32),
              jax.random.normal(keys[4], (N, D_IN), jnp.float32)]
    y_list = apply_to_list(x_list)
    jax.block_until_ready(y_list)
    assert isinstance(y_list, list) and len(y_list) == 2
    assert all(y.shape == (N, D_OUT) for y in y_list)
    assert all(jnp.allclose(y, ref(e), **tol) for y, e in zip(y_list, x_list))

    # Case 3: mixed-shape list -> one fused call per same-shape group.
    x_mixed = [jax.random.normal(keys[5], (N, D_IN), jnp.float32),
               jax.random.normal(keys[6], (2 * N, D_IN), jnp.float32),
               jax.random.normal(keys[7], (N, D_IN), jnp.float32)]
    y_mixed = apply_to_list(x_mixed)
    jax.block_until_ready(y_mixed)
    assert all(y.shape == (e.shape[0], D_OUT) for y, e in zip(y_mixed, x_mixed))
    assert all(jnp.allclose(y, ref(e), **tol) for y, e in zip(y_mixed, x_mixed))

    # Case 4: exercise the K-tiled accumulator path (small shapes; force
    # K tiling by shrinking the W-tile budget).
    D_IN2, D_OUT2, N2 = 512, 128, 64
    k2 = jax.random.split(jax.random.PRNGKey(1), 3)
    w2 = jax.random.normal(k2[0], (D_IN2, D_OUT2), jnp.float32) / jnp.sqrt(D_IN2)
    b2 = jax.random.normal(k2[1], (1, D_OUT2), jnp.float32) * 0.01
    inner2 = PallasLinear(w2, b2, w_tile_budget_bytes=1)  # forces K tiling (tk=256, nk=2)
    x2 = jax.random.normal(k2[2], (N2, D_IN2), jnp.float32)
    y2 = ApplyToList(inner2)(x2)
    jax.block_until_ready(y2)
    assert y2.shape == (N2, D_OUT2)
    assert jnp.allclose(y2, x2 @ w2 + b2, atol=1e-1, rtol=5e-2)

    print("KERNEL_OK")
</pallas_src>

<mosaic_0001>
module attributes {stable_mosaic.version = 11 : i64} {
  func.func @_linear_kernel(%arg0: i32, %arg1: i32, %arg2: memref<1x8x32xf32, #tpu.memory_space<vmem>>, %arg3: memref<32x32xbf16, #tpu.memory_space<vmem>>, %arg4: memref<1x32xf32, #tpu.memory_space<vmem>>, %arg5: memref<1x8x32xf32, #tpu.memory_space<vmem>>) attributes {dimension_semantics = [#tpu.dimension_semantics<parallel>, #tpu.dimension_semantics<parallel>], iteration_bounds = array<i64: 1, 1>, scalar_prefetch = 0 : i64, scratch_operands = 0 : i64, tpu.core_type = #tpu.core_type<tc>, window_params = [{transform_indices = @transform_0, window_bounds = array<i64: 1, 8, 32>}, {pipeline_mode = #tpu.pipeline_mode<synchronous>, transform_indices = @transform_1, window_bounds = array<i64: 32, 32>}, {pipeline_mode = #tpu.pipeline_mode<synchronous>, transform_indices = @transform_2, window_bounds = array<i64: 1, 32>}, {transform_indices = @transform_3, window_bounds = array<i64: 1, 8, 32>}]} {
    %c0 = arith.constant 0 : index
    %c0_0 = arith.constant 0 : index
    %c0_1 = arith.constant 0 : index
    %0 = vector.load %arg2[%c0, %c0_0, %c0_1] : memref<1x8x32xf32, #tpu.memory_space<vmem>>, vector<1x8x32xf32>
    %1 = vector.shape_cast %0 : vector<1x8x32xf32> to vector<8x32xf32>
    %2 = arith.truncf %1 : vector<8x32xf32> to vector<8x32xbf16>
    %c0_2 = arith.constant 0 : index
    %c0_3 = arith.constant 0 : index
    %3 = vector.load %arg3[%c0_2, %c0_3] : memref<32x32xbf16, #tpu.memory_space<vmem>>, vector<32x32xbf16>
    %cst = arith.constant dense<0.000000e+00> : vector<8x32xf32>
    %4 = tpu.matmul %2, %3, %cst {dimension_numbers = #tpu.dot_dimension_numbers<[1], [0], [0], [1], [0, 0, 1, 1], [], []>} : vector<8x32xbf16>, vector<32x32xbf16>, vector<8x32xf32> -> vector<8x32xf32>
    %c0_4 = arith.constant 0 : index
    %c0_5 = arith.constant 0 : index
    %5 = vector.load %arg4[%c0_4, %c0_5] : memref<1x32xf32, #tpu.memory_space<vmem>>, vector<1x32xf32>
    %6 = vector.broadcast %5 : vector<1x32xf32> to vector<8x32xf32>
    %7 = arith.addf %4, %6 : vector<8x32xf32>
    %c0_6 = arith.constant 0 : index
    %c0_7 = arith.constant 0 : index
    %c0_8 = arith.constant 0 : index
    %8 = vector.load %arg5[%c0_6, %c0_7, %c0_8] : memref<1x8x32xf32, #tpu.memory_space<vmem>>, vector<1x8x32xf32>
    %9 = vector.shape_cast %8 : vector<1x8x32xf32> to vector<8x32xf32>
    %10 = vector.shape_cast %7 : vector<8x32xf32> to vector<1x8x32xf32>
    tpu.vector_store %arg5[%c0_6, %c0_7, %c0_8], %10 {strides = array<i32>} : memref<1x8x32xf32, #tpu.memory_space<vmem>>, vector<1x8x32xf32>,
    return
  }
  func.func @transform_0(%arg0: i32, %arg1: i32) -> (i32, i32, i32) {
    %c0_i32 = arith.constant 0 : i32
    %c0_i32_0 = arith.constant 0 : i32
    return %arg0, %arg1, %c0_i32 : i32, i32, i32
  }
  func.func @transform_1(%arg0: i32, %arg1: i32) -> (i32, i32) {
    %c0_i32 = arith.constant 0 : i32
    %c0_i32_0 = arith.constant 0 : i32
    %c0_i32_1 = arith.constant 0 : i32
    return %c0_i32, %c0_i32_0 : i32, i32
  }
  func.func @transform_2(%arg0: i32, %arg1: i32) -> (i32, i32) {
    %c0_i32 = arith.constant 0 : i32
    %c0_i32_0 = arith.constant 0 : i32
    %c0_i32_1 = arith.constant 0 : i32
    return %c0_i32, %c0_i32_0 : i32, i32
  }
  func.func @transform_3(%arg0: i32, %arg1: i32) -> (i32, i32, i32) {
    %c0_i32 = arith.constant 0 : i32
    %c0_i32_0 = arith.constant 0 : i32
    return %arg0, %arg1, %c0_i32 : i32, i32, i32
  }
}

</mosaic_0001>

<llo_original>
// kernel: _fused_linear.1
$region0: #{_fused_linear.1}
  #allocation0 [shape = 'u32[]', space=smem, size = 0x4, offset = 0x4, fixed_abs, tag = 'smem constant byte address 0x4 - core index']
  #allocation1 [shape = 'u32[144,128]{1,0:T(1,128)}', space=vmem, size = 0x12000, scoped, tag = 'internal scratch']
  %s0 = inlined_call_operand.hbm [shape: f32[1,8,32], index: 0, kind: input, shape index: {}]
  %s1 = inlined_call_operand.hbm [shape: bf16[32,32], index: 1, kind: input, shape index: {}]
  %s2 = inlined_call_operand.vmem [shape: f32[1,32], index: 2, kind: input, shape index: {}]
  %s3 = inlined_call_operand.hbm [shape: f32[1,8,32], index: 3, kind: output, shape index: {}]
  %s4 = sld [smem:[#allocation0]]
  $region30: #{_fused_linear.1} parent=0
    _
  %s6 = ssub.s32 1, %s4
  %s7 = scalar_select 0, %s6, %s4
  $region1: #{_fused_linear.1} parent=0
    #allocation2 [shape = 'u8[4096]{0}', space=vmem, size = 0x1000, scoped, tag = 'input window, operand 0, single buffered']
    #allocation3 [shape = 's32[1]{0}', space=sflag, size = 0x4, scoped, tag = 'scoped memory for _fused_linear.1']
    #allocation4 [shape = 's32[1]{0}', space=sflag, size = 0x4, scoped, tag = 'scoped memory for _fused_linear.1']
    #allocation5 [shape = 'u8[8192]{0}', space=vmem, size = 0x2000, scoped, tag = 'input window, operand 1, single buffered']
    #allocation6 [shape = 's32[1]{0}', space=sflag, size = 0x4, scoped, tag = 'scoped memory for _fused_linear.1']
    #allocation7 [shape = 'u8[4096]{0}', space=vmem, size = 0x1000, scoped, tag = 'output window, operand 0, single buffered']
    %8 = vsyncpa [#allocation3], 0
    %9 = vsyncpa [#allocation6], 0
    %10 = vsyncpa [#allocation4], 0
    // Predicated region
    $region2: #{_fused_linear.1} parent=1 // pred_check
      _
    $region3: #{_fused_linear.1} parent=1 // pred_check_branch
      %12 = sbr.rel (0) target = $region5
    $region4: #{_fused_linear.1} parent=1 // pred_region
      %s14 = ssub.s32 128, 128
      %15 = vsyncadd [#allocation3], %s14
      %s17 = sshll.u32 [#allocation2], 4
      %s18 = int_to_ptr.vmem [resolvable:$true] %s17
      %20 = dma.hbm_to_vmem [thread:$0]  %s0, 128, %s18, [#allocation3]
    $region5: #{_fused_linear.1} parent=1 // pred_fallthru
      _
    // Predicated region
    $region6: #{_fused_linear.1} parent=1 // pred_check
      _
    $region7: #{_fused_linear.1} parent=1 // pred_check_branch
      %22 = sbr.rel (0) target = $region9
    $region8: #{_fused_linear.1} parent=1 // pred_region
      %s24 = ssub.s32 256, 256
      %25 = vsyncadd [#allocation6], %s24
      %s26 = sshll.u32 [#allocation5], 4
      %s27 = int_to_ptr.vmem [resolvable:$true] %s26
      %32 = dma.hbm_to_vmem [thread:$0]  %s1, 256, %s27, [#allocation6], 64, 64, 4
    $region9: #{_fused_linear.1} parent=1 // pred_fallthru
      _
    // Predicated region
    $region10: #{_fused_linear.1} parent=1 // pred_check
      _
    $region11: #{_fused_linear.1} parent=1 // pred_check_branch
      %34 = sbr.rel (0) target = $region13
    $region12: #{_fused_linear.1} parent=1 // pred_region
      _
    $region13: #{_fused_linear.1} parent=1 // pred_fallthru
      _
    // Predicated region
    $region14: #{_fused_linear.1} parent=1 // pred_check
      _
    $region15: #{_fused_linear.1} parent=1 // pred_check_branch
      %36 = sbr.rel (0) target = $region17
    $region16: #{_fused_linear.1} parent=1 // pred_region
      %37 = dma.done [#allocation3], 128
    $region17: #{_fused_linear.1} parent=1 // pred_fallthru
      _
    // Predicated region
    $region18: #{_fused_linear.1} parent=1 // pred_check
      _
    $region19: #{_fused_linear.1} parent=1 // pred_check_branch
      %39 = sbr.rel (0) target = $region21
    $region20: #{_fused_linear.1} parent=1 // pred_region
      %40 = dma.done [#allocation6], 256
    $region21: #{_fused_linear.1} parent=1 // pred_fallthru
      _
    %v42 = vld [vmem:[#allocation2] sm:$0xff]
    %v43 = vpack.c.bf16 %v42, %v42
    %v44 = vld [vmem:[#allocation5] sm:$0xf]
    %v45 = vld [vmem:[#allocation5 + $0x4] sm:$0xf]
    %v46 = vld [vmem:[#allocation5 + $0x8] sm:$0xf]
    %v47 = vld [vmem:[#allocation5 + $0xc] sm:$0xf]
    %v48 = vld [vmem:[%s2] sm:$0x1]
    %v50 = vlaneseq
    %v51 = vshrl.u32 %v50, 7
    %v52 = vsub.s32 0, %v51
    %v53 = vrot.slane %v48, %v52
    %v59 = vunpack.c.l.b16 %v44
    %v60 = vunpack.c.l.b16 %v45
    %v61 = vunpack.c.l.b16 %v46
    %v62 = vunpack.c.l.b16 %v47
    %v63 = vpack.c.b16 %v60, %v59
    %v64 = vpack.c.b16 %v62, %v61
    %vm67 = vcmask 261120
    %v69 = vsel %vm67, %v43, 0
    %71 = vmatprep.subr.bf16.mxu0 0
    %72 = vmatpush1.bf16.msra.mxu0 %v63
    %73 = vmatprep.subr.bf16.mxu0 0
    %74 = vmatpush1.bf16.msra.mxu0 %v64
    %75 = vmatprep.subr.bf16.mxu0 0
    %76 = vmatpush1.bf16.msra.mxu0 0
    %77 = vmatprep.subr.bf16.mxu0 0
    %78 = vmatpush1.bf16.msra.mxu0 0
    %79 = vmatprep.subr.bf16.mxu0 0
    %80 = vmatpush1.bf16.msra.mxu0 0
    %81 = vmatprep.subr.bf16.mxu0 0
    %82 = vmatpush1.bf16.msra.mxu0 0
    %83 = vmatprep.subr.bf16.mxu0 0
    %84 = vmatpush1.bf16.msra.mxu0 0
    %85 = vmatprep.subr.bf16.mxu0 0
    %86 = vmatpush1.bf16.msra.mxu0 0
    %87 = vmatprep.subr.bf16.mxu0 0
    %88 = vmatpush1.bf16.msra.mxu0 0
    %89 = vmatprep.subr.bf16.mxu0 0
    %90 = vmatpush1.bf16.msra.mxu0 0
    %91 = vmatprep.subr.bf16.mxu0 0
    %92 = vmatpush1.bf16.msra.mxu0 0
    %93 = vmatprep.subr.bf16.mxu0 0
    %94 = vmatpush1.bf16.msra.mxu0 0
    %95 = vmatprep.subr.bf16.mxu0 0
    %96 = vmatpush1.bf16.msra.mxu0 0
    %97 = vmatprep.subr.bf16.mxu0 0
    %98 = vmatpush1.bf16.msra.mxu0 0
    %99 = vmatprep.subr.bf16.mxu0 0
    %100 = vmatpush1.bf16.msra.mxu0 0
    %101 = vmatprep.subr.bf16.mxu0 0
    %102 = vmatpush1.bf16.msra.mxu0 0
    %103 = vmatprep.mubr.bf16.mxu0 0
    %104 = vmatmul.mubr.bf16.gmra.mrb[0].mxu0 %v69
    %v105 = vpop.f32.mrb[0].mxu0
    %v106 = vadd.f32 %v53, %v105
    %v107 = vpop.f32.mrb[0].mxu0
    %v108 = vpop.f32.mrb[0].mxu0
    %v109 = vpop.f32.mrb[0].mxu0
    %110 = vdwg.mxu0
    %111 = vst.msk [vmem:[#allocation7] sm:$0xff] %vm67, %v106
    // Predicated region
    $region22: #{_fused_linear.1} parent=1 // pred_check
      _
    $region23: #{_fused_linear.1} parent=1 // pred_check_branch
      %113 = sbr.rel (0) target = $region25
    $region24: #{_fused_linear.1} parent=1 // pred_region
      %s115 = ssub.s32 128, 128
      %116 = vsyncadd [#allocation4], %s115
      %s118 = sshll.u32 [#allocation7], 4
      %s119 = int_to_ptr.vmem [resolvable:$true] %s118
      %121 = dma.vmem_to_hbm [thread:$0]  %s119, 128, %s3, [#allocation4]
    $region25: #{_fused_linear.1} parent=1 // pred_fallthru
      _
    // Predicated region
    $region26: #{_fused_linear.1} parent=1 // pred_check
      _
    $region27: #{_fused_linear.1} parent=1 // pred_check_branch
      %123 = sbr.rel (0) target = $region29
    $region28: #{_fused_linear.1} parent=1 // pred_region
      %124 = dma.done [#allocation4], 128
    $region29: #{_fused_linear.1} parent=1 // pred_fallthru
      _
    %125 = vsyncpa [#allocation3], 1
    %126 = vsyncpa [#allocation6], 1
    %127 = vsyncpa [#allocation4], 1

</llo_original>
